<compile_context>
chip_gen: v6e
topology: v6e:2x2x1
jax: 0.10.0
libtpu: 0.0.40
codegen_flags: <defaults>
</compile_context>

<pallas_src>
import functools

import jax
import jax.numpy as jnp
import numpy as np
from jax.experimental import pallas as pl
from jax.experimental.pallas import tpu as pltpu

D_IN, H1, H2, D_OUT = 384, 96, 48, 14


def _collapsed_mlp_kernel(x_ref, wc_ref, bc_ref, o_ref):
    """out = x @ Wc + bc for one batch tile (bf16 operands, f32 MXU accumulation)."""
    x = x_ref[...].astype(jnp.bfloat16)                               # (tb, 384)
    o = jnp.dot(x, wc_ref[...], preferred_element_type=jnp.float32)   # (tb, 14) f32
    o_ref[...] = (o + bc_ref[...]).astype(o_ref.dtype)


def _round_up(n, m):
    return ((n + m - 1) // m) * m


def _pick_tb(B, requested=None):
    """Batch tile: multiple of 16, <= 1024, >= 2 grid steps for large B (v7x: 2 TCs)."""
    if requested is not None:
        return max(16, _round_up(requested, 16))
    tb = min(1024, _round_up(pl.cdiv(B, 2), 16))
    return max(16, tb)


def init_params(key):
    """Deterministic raw per-layer params (f32), matching the PyTorch module shapes."""
    ks = jax.random.split(key, 6)

    def w(k, fan_in, shape):
        return jax.random.normal(k, shape, jnp.float32) / np.sqrt(fan_in)

    return dict(
        w1=w(ks[0], D_IN, (D_IN, H1)),
        b1=jax.random.normal(ks[1], (H1,), jnp.float32) * 0.05,
        w2=w(ks[2], H1, (H1, H2)),
        b2=jax.random.normal(ks[3], (H2,), jnp.float32) * 0.05,
        w3=w(ks[4], H2, (H2, D_OUT)),
        b3=jax.random.normal(ks[5], (D_OUT,), jnp.float32) * 0.05,
    )


def prepare_params(raw):
    """One-time collapse of the purely-linear stack (hoisted out of the hot path)."""
    wc = raw["w1"] @ raw["w2"] @ raw["w3"]                            # (384, 14), exact f32
    bc = (raw["b1"] @ raw["w2"] + raw["b2"]) @ raw["w3"] + raw["b3"]  # (14,),     exact f32
    return dict(wc=wc.astype(jnp.bfloat16),          # bf16: MXU-native, half the weight DMA
                bc=bc.reshape(1, D_OUT).astype(jnp.float32))


def model_forward(x, prepared, *, tb=None):
    """x: (B, 384) float32 (or bfloat16) -> (B, 14) float32."""
    B, d = x.shape
    assert d == D_IN, d
    tb = _pick_tb(B, tb)
    grid = (pl.cdiv(B, tb),)

    x_bytes = jnp.dtype(x.dtype).itemsize
    cost = pl.CostEstimate(
        flops=2 * B * D_IN * D_OUT,
        transcendentals=0,
        bytes_accessed=(B * D_IN * x_bytes + B * D_OUT * 4
                        + D_IN * D_OUT * 2 + D_OUT * 4),
    )

    # Double-buffered x + out tiles; only raise the scoped-VMEM limit when a very
    # large user-supplied tb actually needs it (v5e default is ~16 MiB).
    vmem_need = (2 * tb * D_IN * x_bytes + 2 * tb * D_OUT * 4
                 + D_IN * D_OUT * 2 + D_OUT * 4)
    vmem_limit = None
    if vmem_need > 12 * 1024 * 1024:
        vmem_limit = min(_round_up(2 * vmem_need, 1 << 20), 96 * 1024 * 1024)
    compiler_params = pltpu.CompilerParams(
        dimension_semantics=("parallel",), vmem_limit_bytes=vmem_limit)

    fixed = lambda i: (0, 0)                 # weights/bias: resident, same block each step
    return pl.pallas_call(
        _collapsed_mlp_kernel,
        out_shape=jax.ShapeDtypeStruct((B, D_OUT), jnp.float32),
        grid_spec=pltpu.PrefetchScalarGridSpec(
            num_scalar_prefetch=0,
            grid=grid,
            in_specs=[
                pl.BlockSpec((tb, D_IN), lambda i: (i, 0)),   # batch row-tile (ragged last)
                pl.BlockSpec((D_IN, D_OUT), fixed),           # collapsed weight, bf16
                pl.BlockSpec((1, D_OUT), fixed),              # collapsed bias, f32
            ],
            out_specs=pl.BlockSpec((tb, D_OUT), lambda i: (i, 0)),
        ),
        compiler_params=compiler_params,
        cost_estimate=cost,
    )(x, prepared["wc"], prepared["bc"])


def ref_forward_f32(x, raw):
    """Original 3-layer f32 semantics (dropout = identity at eval)."""
    h1 = x @ raw["w1"] + raw["b1"]
    h2 = h1 @ raw["w2"] + raw["b2"]
    return h2 @ raw["w3"] + raw["b3"]


def ref_forward_collapsed(x, prepared):
    """Pure-JAX reference matching the kernel's bf16-operand / f32-accum math."""
    return jnp.dot(x.astype(jnp.bfloat16), prepared["wc"],
                   preferred_element_type=jnp.float32) + prepared["bc"]


if __name__ == "__main__":
    key = jax.random.PRNGKey(0)
    kx, kp = jax.random.split(key)

    B = 20                                   # small demo batch, not a multiple of the tile
    x = jax.random.normal(kx, (B, D_IN), jnp.float32)
    raw = init_params(kp)
    prepared = prepare_params(raw)           # one-time collapse, outside the jitted hot path

    fwd = jax.jit(functools.partial(model_forward, tb=16))   # 2 grid steps, ragged last block
    out = jax.block_until_ready(fwd(x, prepared))
    assert out.shape == (B, D_OUT), out.shape

    # Exact-math reference (same bf16 operands / f32 accumulation as the kernel).
    ref_bf16 = jax.block_until_ready(ref_forward_collapsed(x, prepared))
    np.testing.assert_allclose(np.asarray(out), np.asarray(ref_bf16),
                               rtol=1e-4, atol=1e-4)

    # Original-module f32 semantics; looser tolerance absorbs bf16 operand rounding.
    ref_f32 = jax.block_until_ready(ref_forward_f32(x, raw))
    np.testing.assert_allclose(np.asarray(out), np.asarray(ref_f32),
                               rtol=2e-2, atol=5e-2)

    print("KERNEL_OK")
</pallas_src>

<mosaic_0001>
module attributes {stable_mosaic.version = 11 : i64} {
  func.func @_collapsed_mlp_kernel(%arg0: i32, %arg1: memref<16x384xf32, #tpu.memory_space<vmem>>, %arg2: memref<384x14xbf16, #tpu.memory_space<vmem>>, %arg3: memref<1x14xf32, #tpu.memory_space<vmem>>, %arg4: memref<16x14xf32, #tpu.memory_space<vmem>>) attributes {dimension_semantics = [#tpu.dimension_semantics<parallel>], iteration_bounds = array<i64: 2>, scalar_prefetch = 0 : i64, scratch_operands = 0 : i64, tpu.core_type = #tpu.core_type<tc>, window_params = [{transform_indices = @transform_0, window_bounds = array<i64: 16, 384>}, {pipeline_mode = #tpu.pipeline_mode<synchronous>, transform_indices = @transform_1, window_bounds = array<i64: 384, 14>}, {pipeline_mode = #tpu.pipeline_mode<synchronous>, transform_indices = @transform_2, window_bounds = array<i64: 1, 14>}, {transform_indices = @transform_3, window_bounds = array<i64: 16, 14>}]} {
    %c0 = arith.constant 0 : index
    %c0_0 = arith.constant 0 : index
    %0 = vector.load %arg1[%c0, %c0_0] : memref<16x384xf32, #tpu.memory_space<vmem>>, vector<16x384xf32>
    %1 = arith.truncf %0 : vector<16x384xf32> to vector<16x384xbf16>
    %c0_1 = arith.constant 0 : index
    %c0_2 = arith.constant 0 : index
    %2 = vector.load %arg2[%c0_1, %c0_2] : memref<384x14xbf16, #tpu.memory_space<vmem>>, vector<384x14xbf16>
    %cst = arith.constant dense<0.000000e+00> : vector<16x14xf32>
    %3 = tpu.matmul %1, %2, %cst {dimension_numbers = #tpu.dot_dimension_numbers<[1], [0], [0], [1], [0, 0, 1, 1], [], []>} : vector<16x384xbf16>, vector<384x14xbf16>, vector<16x14xf32> -> vector<16x14xf32>
    %c0_3 = arith.constant 0 : index
    %c0_4 = arith.constant 0 : index
    %4 = vector.load %arg3[%c0_3, %c0_4] : memref<1x14xf32, #tpu.memory_space<vmem>>, vector<1x14xf32>
    %5 = vector.broadcast %4 : vector<1x14xf32> to vector<16x14xf32>
    %6 = arith.addf %3, %5 : vector<16x14xf32>
    %c0_5 = arith.constant 0 : index
    %c0_6 = arith.constant 0 : index
    %7 = vector.load %arg4[%c0_5, %c0_6] : memref<16x14xf32, #tpu.memory_space<vmem>>, vector<16x14xf32>
    tpu.vector_store %arg4[%c0_5, %c0_6], %6 {strides = array<i32>} : memref<16x14xf32, #tpu.memory_space<vmem>>, vector<16x14xf32>,
    return
  }
  func.func @transform_0(%arg0: i32) -> (i32, i32) {
    %c0_i32 = arith.constant 0 : i32
    %c0_i32_0 = arith.constant 0 : i32
    return %arg0, %c0_i32 : i32, i32
  }
  func.func @transform_1(%arg0: i32) -> (i32, i32) {
    %c0_i32 = arith.constant 0 : i32
    %c0_i32_0 = arith.constant 0 : i32
    %c0_i32_1 = arith.constant 0 : i32
    return %c0_i32, %c0_i32_0 : i32, i32
  }
  func.func @transform_2(%arg0: i32) -> (i32, i32) {
    %c0_i32 = arith.constant 0 : i32
    %c0_i32_0 = arith.constant 0 : i32
    %c0_i32_1 = arith.constant 0 : i32
    return %c0_i32, %c0_i32_0 : i32, i32
  }
  func.func @transform_3(%arg0: i32) -> (i32, i32) {
    %c0_i32 = arith.constant 0 : i32
    %c0_i32_0 = arith.constant 0 : i32
    return %arg0, %c0_i32 : i32, i32
  }
}

</mosaic_0001>

<llo_original>
// kernel: model_forward.1
$region0: #{model_forward.1}
  #allocation0 [shape = 'u32[]', space=smem, size = 0x4, offset = 0x4, fixed_abs, tag = 'smem constant byte address 0x4 - core index']
  #allocation1 [shape = 'u32[144,128]{1,0:T(1,128)}', space=vmem, size = 0x12000, scoped, tag = 'internal scratch']
  %s0 = inlined_call_operand.vmem [shape: f32[20,384], index: 0, kind: input, shape index: {}]
  %s1 = inlined_call_operand.vmem [shape: bf16[384,14], index: 1, kind: input, shape index: {}]
  %s2 = inlined_call_operand.vmem [shape: f32[1,14], index: 2, kind: input, shape index: {}]
  %s3 = inlined_call_operand.vmem [shape: f32[20,14], index: 3, kind: output, shape index: {}]
  %s4 = sld [smem:[#allocation0]]
  $region93: #{model_forward.1} parent=0
    _
  %s6 = ssub.s32 1, %s4
  %s7 = scalar_select 0, %s6, %s4
  $region1: #{model_forward.1} parent=0
    #allocation2 [shape = 'u8[16384]{0}', space=vmem, size = 0x4000, scoped, tag = 'output window, operand 0']
    loop: start=0, step=1, limit=4
    $region2: #{model_forward.1} parent=1 // loop_pre_header
      _
    $region3: #{model_forward.1} parent=1 // loop_header
      %s9 = sphi 0, %s13
      %p10 = scmp.ge.s32.totalorder %s9, 4
      %s19 = sphi 0, %s21
      %s22 = sphi 0, %s19
      %s23 = sphi 0, %s22
      %s39 = sphi 0, %s23
      %s43 = sphi 0, %s43
      %s45 = sphi 0, %s43
      %s46 = sphi 0, %s45
      %s60 = sphi 0, %s46
      %s64 = sphi 0, %s64
      %s66 = sphi 0, %s64
      %s67 = sphi 0, %s66
      %s81 = sphi 0, %s67
      %s87 = sphi 0, %s89
      %s90 = sphi 0, %s87
      %s91 = sphi 0, %s90
      %s107 = sphi 0, %s91
    $region4: #{model_forward.1} parent=1 // loop_header_branch
      %12 = sbr.rel (%p10) target = $region8
    $region5: #{model_forward.1} parent=1 // loop_body
      %s14 = ssub.s32 %s9, 1
      %s15 = ssub.s32 %s9, 2
      %s16 = sadd.s32 %s9, 1
      %s17 = ssub.s32 %s9, %s16
      %p18 = scmp.eq.s32.totalorder %s17, 0
      %s20 = sadd.s32 %s19, 1
      %s21 = scalar_select %p18, %s19, %s20
      %p24 = pneg %p18
      %p25 = scmp.eq.s32.totalorder %s9, 1
      %p26 = por %p24, %p25
      %p27 = scmp.ne.s32.totalorder %s19, %s22
      %p28 = scmp.eq.s32.totalorder %s9, 0
      %p29 = por %p27, %p28
      %p30 = scmp.ne.s32.totalorder %s19, %s22
      %p31 = scmp.eq.s32.totalorder %s14, 1
      %p32 = por %p30, %p31
      %p33 = scmp.ne.s32.totalorder %s22, %s23
      %p34 = scmp.eq.s32.totalorder %s14, 0
      %p35 = por %p33, %p34
      %p36 = scmp.ne.s32.totalorder %s22, %s23
      %p37 = scmp.eq.s32.totalorder %s15, 1
      %p38 = por %p36, %p37
      %p40 = scmp.ne.s32.totalorder %s23, %s39
      %p41 = scmp.eq.s32.totalorder %s15, 0
      %p42 = por %p40, %p41
      %s44 = sadd.s32 %s43, 1
      %p47 = scmp.eq.s32.totalorder %s9, 1
      %p48 = scmp.ne.s32.totalorder %s43, %s45
      %p49 = scmp.eq.s32.totalorder %s9, 0
      %p50 = por %p48, %p49
      %p51 = scmp.ne.s32.totalorder %s43, %s45
      %p52 = scmp.eq.s32.totalorder %s14, 1
      %p53 = por %p51, %p52
      %p54 = scmp.ne.s32.totalorder %s45, %s46
      %p55 = scmp.eq.s32.totalorder %s14, 0
      %p56 = por %p54, %p55
      %p57 = scmp.ne.s32.totalorder %s45, %s46
      %p58 = scmp.eq.s32.totalorder %s15, 1
      %p59 = por %p57, %p58
      %p61 = scmp.ne.s32.totalorder %s46, %s60
      %p62 = scmp.eq.s32.totalorder %s15, 0
      %p63 = por %p61, %p62
      %s65 = sadd.s32 %s64, 1
      %p68 = scmp.eq.s32.totalorder %s9, 1
      %p69 = scmp.ne.s32.totalorder %s64, %s66
      %p70 = scmp.eq.s32.totalorder %s9, 0
      %p71 = por %p69, %p70
      %p72 = scmp.ne.s32.totalorder %s64, %s66
      %p73 = scmp.eq.s32.totalorder %s14, 1
      %p74 = por %p72, %p73
      %p75 = scmp.ne.s32.totalorder %s66, %s67
      %p76 = scmp.eq.s32.totalorder %s14, 0
      %p77 = por %p75, %p76
      %p78 = scmp.ne.s32.totalorder %s66, %s67
      %p79 = scmp.eq.s32.totalorder %s15, 1
      %p80 = por %p78, %p79
      %p82 = scmp.ne.s32.totalorder %s67, %s81
      %p83 = scmp.eq.s32.totalorder %s15, 0
      %p84 = por %p82, %p83
      %s85 = ssub.s32 %s9, %s16
      %p86 = scmp.eq.s32.totalorder %s85, 0
      %s88 = sadd.s32 %s87, 1
      %s89 = scalar_select %p86, %s87, %s88
      %p92 = pneg %p86
      %p93 = scmp.eq.s32.totalorder %s9, 1
      %p94 = por %p92, %p93
      %p95 = scmp.ne.s32.totalorder %s87, %s90
      %p96 = scmp.eq.s32.totalorder %s9, 0
      %p97 = por %p95, %p96
      %p98 = scmp.ne.s32.totalorder %s87, %s90
      %p99 = scmp.eq.s32.totalorder %s14, 1
      %p100 = por %p98, %p99
      %p101 = scmp.ne.s32.totalorder %s90, %s91
      %p102 = scmp.eq.s32.totalorder %s14, 0
      %p103 = por %p101, %p102
      %p104 = scmp.ne.s32.totalorder %s90, %s91
      %p105 = scmp.eq.s32.totalorder %s15, 1
      %p106 = por %p104, %p105
      %p108 = scmp.ne.s32.totalorder %s91, %s107
      %p109 = scmp.eq.s32.totalorder %s15, 0
      %p110 = por %p108, %p109
      %p111 = scmp.le.s32.totalorder 1, %s9
      %p112 = scmp.lt.s32.totalorder %s9, 3
      %p113 = pnand %p111, %p112
      %p114 = pneg %p113
      // Predicated region
      $region9: #{model_forward.1} parent=5 // pred_check
        _
      $region10: #{model_forward.1} parent=5 // pred_check_branch
        %116 = sbr.rel (%p113) target = $region12
      $region11: #{model_forward.1} parent=5 // pred_region
        %s117 = ssub.s32 %s9, 1
        // Predicated region
        $region13: #{model_forward.1} parent=11 // pred_check
          %p118 = pneg %p56
        $region14: #{model_forward.1} parent=11 // pred_check_branch
          %120 = sbr.rel (%p118) target = $region16
        $region15: #{model_forward.1} parent=11 // pred_region
          _
        $region16: #{model_forward.1} parent=11 // pred_fallthru
          _
        // Predicated region
        $region17: #{model_forward.1} parent=11 // pred_check
          %p121 = pneg %p77
        $region18: #{model_forward.1} parent=11 // pred_check_branch
          %123 = sbr.rel (%p121) target = $region20
        $region19: #{model_forward.1} parent=11 // pred_region
          _
        $region20: #{model_forward.1} parent=11 // pred_fallthru
          _
      $region12: #{model_forward.1} parent=5 // pred_fallthru
        _
      %p124 = scmp.lt.s32.totalorder %s9, 2
      // Predicated region
      $region21: #{model_forward.1} parent=5 // pred_check
        %p125 = pneg %p124
      $region22: #{model_forward.1} parent=5 // pred_check_branch
        %127 = sbr.rel (%p125) target = $region24
      $region23: #{model_forward.1} parent=5 // pred_region
        // Predicated region
        $region25: #{model_forward.1} parent=23 // pred_check
          %p128 = pneg %p29
        $region26: #{model_forward.1} parent=23 // pred_check_branch
          %130 = sbr.rel (%p128) target = $region28
        $region27: #{model_forward.1} parent=23 // pred_region
          %s131 = smul.u32 2, %s9
          %s132 = ssub.s32 3, %s131
          %p133 = scmp.lt.s32.totalorder %s132, 2
          %s134 = scalar_select %p133, %s132, 2
          %s135 = smul.u32 128, %s134
          %s136 = smul.u32 %s135, 3
          %p137 = scmp.lt.s32.totalorder %s131, 2
          %s138 = scalar_select %p137, %s131, 2
          %s139 = smul.addr %s138, 3
          %s140 = smul.addr %s139, 8
          %s141 = scalar_lea.vmem %s0, %s140
          %s142 = smul.u32 2, %s9
          %s143 = ssub.s32 3, %s142
          %p144 = scmp.lt.s32.totalorder %s143, 2
          %s145 = scalar_select %p144, %s143, 2
          %s146 = smul.u32 128, %s145
          %s147 = smul.u32 %s146, 3
        $region28: #{model_forward.1} parent=23 // pred_fallthru
          _
      $region24: #{model_forward.1} parent=5 // pred_fallthru
        _
      %p148 = scmp.le.s32.totalorder 1, %s9
      %p149 = scmp.lt.s32.totalorder %s9, 3
      %p150 = pnand %p148, %p149
      %p151 = pneg %p150
      // Predicated region
      $region29: #{model_forward.1} parent=5 // pred_check
        _
      $region30: #{model_forward.1} parent=5 // pred_check_branch
        %153 = sbr.rel (%p150) target = $region32
      $region31: #{model_forward.1} parent=5 // pred_region
        %s154 = ssub.s32 %s9, 1
        %s155 = smul.u32 2, %s14
        %s156 = ssub.s32 3, %s155
        %p157 = scmp.lt.s32.totalorder %s156, 2
        %s158 = scalar_select %p157, %s156, 2
        %s159 = smul.u32 128, %s158
        %s160 = smul.u32 %s159, 3
        %p161 = scmp.lt.s32.totalorder %s155, 2
        %s162 = scalar_select %p161, %s155, 2
        %s163 = smul.addr %s162, 3
        %s164 = smul.addr %s163, 8
        %s165 = scalar_lea.vmem %s0, %s164
        %p166 = pneg %p35
        %p167 = pneg %p32
        %p168 = pneg %p56
        %p169 = pneg %p53
        %p170 = pneg %p77
        %p171 = pneg %p74
        %p172 = pneg %p103
        %p173 = pneg %p100
        %s174 = sand.u32 %s90, 1
        %s175 = sand.u32 %s90, 1
        %s176 = smul.addr %s175, 16
        %s177 = scalar_lea.vmem [#allocation2], %s176
        %s178 = smul.u32 2, %s14
        %s179 = ssub.s32 3, %s178
        %p180 = scmp.lt.s32.totalorder %s179, 2
        %s181 = scalar_select %p180, %s179, 2
        %s182 = smul.u32 128, %s181
        %s183 = smul.u32 %s182, 3
        %p184 = scmp.lt.s32.totalorder %s178, 2
        %s185 = scalar_select %p184, %s178, 2
        %s186 = smul.addr %s185, 3
        %s187 = smul.addr %s186, 8
        %s188 = scalar_lea.vmem %s0, %s187
        %s189 = smul.u32 2, %s14
        %s190 = ssub.s32 3, %s189
        %p191 = scmp.lt.s32.totalorder %s190, 2
        %s192 = scalar_select %p191, %s190, 2
        %s193 = smul.u32 128, %s192
        %s194 = smul.u32 %s193, 3
        %s195 = smul.u32 2, %s14
        %s196 = ssub.s32 3, %s195
        %p197 = scmp.lt.s32.totalorder %s196, 2
        %s198 = scalar_select %p197, %s196, 2
        %s199 = smul.u32 128, %s198
        %v201 = vld [vmem:[%s188] sm:$0xff]
        %v202 = vld [vmem:[%s188 + $0x8] sm:$0xff]
        %v203 = vld [vmem:[%s188 + $0x10] sm:$0xff]
        %v204 = vld [vmem:[%s188 + $0x18] sm:$0xff]
        %v205 = vld [vmem:[%s188 + $0x20] sm:$0xff]
        %v206 = vld [vmem:[%s188 + $0x28] sm:$0xff]
        %v207 = vpack.c.bf16 %v204, %v201
        %v208 = vpack.c.bf16 %v205, %v202
        %v209 = vpack.c.bf16 %v206, %v203
        %v210 = vld [vmem:[%s1] sm:$0xf]
        %v211 = vld [vmem:[%s1 + $0x4] sm:$0xf]
        %v212 = vld [vmem:[%s1 + $0x8] sm:$0xf]
        %v213 = vld [vmem:[%s1 + $0xc] sm:$0xf]
        %v214 = vld [vmem:[%s1 + $0x10] sm:$0xf]
        %v215 = vld [vmem:[%s1 + $0x14] sm:$0xf]
        %v216 = vld [vmem:[%s1 + $0x18] sm:$0xf]
        %v217 = vld [vmem:[%s1 + $0x1c] sm:$0xf]
        %v218 = vld [vmem:[%s1 + $0x20] sm:$0xf]
        %v219 = vld [vmem:[%s1 + $0x24] sm:$0xf]
        %v220 = vld [vmem:[%s1 + $0x28] sm:$0xf]
        %v221 = vld [vmem:[%s1 + $0x2c] sm:$0xf]
        %v222 = vld [vmem:[%s1 + $0x30] sm:$0xf]
        %v223 = vld [vmem:[%s1 + $0x34] sm:$0xf]
        %v224 = vld [vmem:[%s1 + $0x38] sm:$0xf]
        %v225 = vld [vmem:[%s1 + $0x3c] sm:$0xf]
        %v226 = vld [vmem:[%s1 + $0x40] sm:$0xf]
        %v227 = vld [vmem:[%s1 + $0x44] sm:$0xf]
        %v228 = vld [vmem:[%s1 + $0x48] sm:$0xf]
        %v229 = vld [vmem:[%s1 + $0x4c] sm:$0xf]
        %v230 = vld [vmem:[%s1 + $0x50] sm:$0xf]
        %v231 = vld [vmem:[%s1 + $0x54] sm:$0xf]
        %v232 = vld [vmem:[%s1 + $0x58] sm:$0xf]
        %v233 = vld [vmem:[%s1 + $0x5c] sm:$0xf]
        %v234 = vld [vmem:[%s1 + $0x60] sm:$0xf]
        %v235 = vld [vmem:[%s1 + $0x64] sm:$0xf]
        %v236 = vld [vmem:[%s1 + $0x68] sm:$0xf]
        %v237 = vld [vmem:[%s1 + $0x6c] sm:$0xf]
        %v238 = vld [vmem:[%s1 + $0x70] sm:$0xf]
        %v239 = vld [vmem:[%s1 + $0x74] sm:$0xf]
        %v240 = vld [vmem:[%s1 + $0x78] sm:$0xf]
        %v241 = vld [vmem:[%s1 + $0x7c] sm:$0xf]
        %v242 = vld [vmem:[%s1 + $0x80] sm:$0xf]
        %v243 = vld [vmem:[%s1 + $0x84] sm:$0xf]
        %v244 = vld [vmem:[%s1 + $0x88] sm:$0xf]
        %v245 = vld [vmem:[%s1 + $0x8c] sm:$0xf]
        %v246 = vld [vmem:[%s1 + $0x90] sm:$0xf]
        %v247 = vld [vmem:[%s1 + $0x94] sm:$0xf]
        %v248 = vld [vmem:[%s1 + $0x98] sm:$0xf]
        %v249 = vld [vmem:[%s1 + $0x9c] sm:$0xf]
        %v250 = vld [vmem:[%s1 + $0xa0] sm:$0xf]
        %v251 = vld [vmem:[%s1 + $0xa4] sm:$0xf]
        %v252 = vld [vmem:[%s1 + $0xa8] sm:$0xf]
        %v253 = vld [vmem:[%s1 + $0xac] sm:$0xf]
        %v254 = vld [vmem:[%s1 + $0xb0] sm:$0xf]
        %v255 = vld [vmem:[%s1 + $0xb4] sm:$0xf]
        %v256 = vld [vmem:[%s1 + $0xb8] sm:$0xf]
        %v257 = vld [vmem:[%s1 + $0xbc] sm:$0xf]
        %v258 = vld [vmem:[%s2] sm:$0x1]
        %v260 = vlaneseq
        %v261 = vshrl.u32 %v260, 7
        %v262 = vsub.s32 0, %v261
        %v263 = vrot.slane %v258, %v262
        %v313 = vunpack.c.l.b16 %v210
        %v314 = vunpack.c.l.b16 %v211
        %v315 = vunpack.c.l.b16 %v212
        %v316 = vunpack.c.l.b16 %v213
        %v317 = vunpack.c.l.b16 %v214
        %v318 = vunpack.c.l.b16 %v215
        %v319 = vunpack.c.l.b16 %v216
        %v320 = vunpack.c.l.b16 %v217
        %v321 = vunpack.c.l.b16 %v218
        %v322 = vunpack.c.l.b16 %v219
        %v323 = vunpack.c.l.b16 %v220
        %v324 = vunpack.c.l.b16 %v221
        %v325 = vunpack.c.l.b16 %v222
        %v326 = vunpack.c.l.b16 %v223
        %v327 = vunpack.c.l.b16 %v224
        %v328 = vunpack.c.l.b16 %v225
        %v329 = vunpack.c.l.b16 %v226
        %v330 = vunpack.c.l.b16 %v227
        %v331 = vunpack.c.l.b16 %v228
        %v332 = vunpack.c.l.b16 %v229
        %v333 = vunpack.c.l.b16 %v230
        %v334 = vunpack.c.l.b16 %v231
        %v335 = vunpack.c.l.b16 %v232
        %v336 = vunpack.c.l.b16 %v233
        %v337 = vunpack.c.l.b16 %v234
        %v338 = vunpack.c.l.b16 %v235
        %v339 = vunpack.c.l.b16 %v236
        %v340 = vunpack.c.l.b16 %v237
        %v341 = vunpack.c.l.b16 %v238
        %v342 = vunpack.c.l.b16 %v239
        %v343 = vunpack.c.l.b16 %v240
        %v344 = vunpack.c.l.b16 %v241
        %v345 = vunpack.c.l.b16 %v242
        %v346 = vunpack.c.l.b16 %v243
        %v347 = vunpack.c.l.b16 %v244
        %v348 = vunpack.c.l.b16 %v245
        %v349 = vunpack.c.l.b16 %v246
        %v350 = vunpack.c.l.b16 %v247
        %v351 = vunpack.c.l.b16 %v248
        %v352 = vunpack.c.l.b16 %v249
        %v353 = vunpack.c.l.b16 %v250
        %v354 = vunpack.c.l.b16 %v251
        %v355 = vunpack.c.l.b16 %v252
        %v356 = vunpack.c.l.b16 %v253
        %v357 = vunpack.c.l.b16 %v254
        %v358 = vunpack.c.l.b16 %v255
        %v359 = vunpack.c.l.b16 %v256
        %v360 = vunpack.c.l.b16 %v257
        %v361 = vpack.c.b16 %v314, %v313
        %v362 = vpack.c.b16 %v316, %v315
        %v363 = vpack.c.b16 %v318, %v317
        %v364 = vpack.c.b16 %v320, %v319
        %v365 = vpack.c.b16 %v322, %v321
        %v366 = vpack.c.b16 %v324, %v323
        %v367 = vpack.c.b16 %v326, %v325
        %v368 = vpack.c.b16 %v328, %v327
        %v369 = vpack.c.b16 %v330, %v329
        %v370 = vpack.c.b16 %v332, %v331
        %v371 = vpack.c.b16 %v334, %v333
        %v372 = vpack.c.b16 %v336, %v335
        %v373 = vpack.c.b16 %v338, %v337
        %v374 = vpack.c.b16 %v340, %v339
        %v375 = vpack.c.b16 %v342, %v341
        %v376 = vpack.c.b16 %v344, %v343
        %v377 = vpack.c.b16 %v346, %v345
        %v378 = vpack.c.b16 %v348, %v347
        %v379 = vpack.c.b16 %v350, %v349
        %v380 = vpack.c.b16 %v352, %v351
        %v381 = vpack.c.b16 %v354, %v353
        %v382 = vpack.c.b16 %v356, %v355
        %v383 = vpack.c.b16 %v358, %v357
        %v384 = vpack.c.b16 %v360, %v359
        %409 = vmatprep.subr.bf16.mxu0 0
        %410 = vmatpush1.bf16.msra.mxu0 %v368
        %411 = vmatprep.subr.bf16.mxu0 0
        %412 = vmatpush1.bf16.msra.mxu0 %v367
        %413 = vmatprep.subr.bf16.mxu0 0
        %414 = vmatpush1.bf16.msra.mxu0 %v366
        %415 = vmatprep.subr.bf16.mxu0 0
        %416 = vmatpush1.bf16.msra.mxu0 %v365
        %417 = vmatprep.subr.bf16.mxu0 0
        %418 = vmatpush1.bf16.msra.mxu0 %v364
        %419 = vmatprep.subr.bf16.mxu0 0
        %420 = vmatpush1.bf16.msra.mxu0 %v363
        %421 = vmatprep.subr.bf16.mxu0 0
        %422 = vmatpush1.bf16.msra.mxu0 %v362
        %423 = vmatprep.subr.bf16.mxu0 0
        %424 = vmatpush1.bf16.msra.mxu0 %v361
        %425 = vmatprep.subr.bf16.mxu0 0
        %426 = vmatpush2.bf16.msra.mxu0 %v376
        %427 = vmatprep.subr.bf16.mxu0 0
        %428 = vmatpush2.bf16.msra.mxu0 %v375
        %429 = vmatprep.subr.bf16.mxu0 0
        %430 = vmatpush2.bf16.msra.mxu0 %v374
        %431 = vmatprep.subr.bf16.mxu0 0
        %432 = vmatpush2.bf16.msra.mxu0 %v373
        %433 = vmatprep.subr.bf16.mxu0 0
        %434 = vmatpush2.bf16.msra.mxu0 %v372
        %435 = vmatprep.subr.bf16.mxu0 0
        %436 = vmatpush2.bf16.msra.mxu0 %v371
        %437 = vmatprep.subr.bf16.mxu0 0
        %438 = vmatpush2.bf16.msra.mxu0 %v370
        %439 = vmatprep.subr.bf16.mxu0 0
        %440 = vmatpush2.bf16.msra.mxu0 %v369
        %441 = vmatprep.mubr.bf16.mxu0 %v208
        %442 = vmatmul.mubr.bf16.gmra.mxu0 %v207
        %v443 = vpop.f32.mrf.mxu0
        %v444 = vadd.f32 %v263, %v443
        %v445 = vpop.f32.mrf.mxu0
        %v446 = vpop.f32.mrf.mxu0
        %v447 = vadd.f32 %v263, %v446
        %v448 = vpop.f32.mrf.mxu0
        %449 = vdwg.mxu0
        %450 = vmatprep.subr.bf16.mxu0 0
        %451 = vmatpush1.bf16.msra.mxu0 %v384
        %452 = vmatprep.subr.bf16.mxu0 0
        %453 = vmatpush1.bf16.msra.mxu0 %v383
        %454 = vmatprep.subr.bf16.mxu0 0
        %455 = vmatpush1.bf16.msra.mxu0 %v382
        %456 = vmatprep.subr.bf16.mxu0 0
        %457 = vmatpush1.bf16.msra.mxu0 %v381
        %458 = vmatprep.subr.bf16.mxu0 0
        %459 = vmatpush1.bf16.msra.mxu0 %v380
        %460 = vmatprep.subr.bf16.mxu0 0
        %461 = vmatpush1.bf16.msra.mxu0 %v379
        %462 = vmatprep.subr.bf16.mxu0 0
        %463 = vmatpush1.bf16.msra.mxu0 %v378
        %464 = vmatprep.subr.bf16.mxu0 0
        %465 = vmatpush1.bf16.msra.mxu0 %v377
        %466 = vmatprep.subr.bf16.mxu0 0
        %467 = vmatpush2.bf16.msra.mxu0 0
        %468 = vmatprep.subr.bf16.mxu0 0
        %469 = vmatpush2.bf16.msra.mxu0 0
        %470 = vmatprep.subr.bf16.mxu0 0
        %471 = vmatpush2.bf16.msra.mxu0 0
        %472 = vmatprep.subr.bf16.mxu0 0
        %473 = vmatpush2.bf16.msra.mxu0 0
        %474 = vmatprep.subr.bf16.mxu0 0
        %475 = vmatpush2.bf16.msra.mxu0 0
        %476 = vmatprep.subr.bf16.mxu0 0
        %477 = vmatpush2.bf16.msra.mxu0 0
        %478 = vmatprep.subr.bf16.mxu0 0
        %479 = vmatpush2.bf16.msra.mxu0 0
        %480 = vmatprep.subr.bf16.mxu0 0
        %481 = vmatpush2.bf16.msra.mxu0 0
        %482 = vmatprep.mubr.bf16.mxu0 0
        %483 = vmatmul.mubr.bf16.gmra.mxu0 %v209
        %v484 = vpop.f32.mrf.mxu0
        %v485 = vadd.f32 %v444, %v484
        %v486 = vpop.f32.mrf.mxu0
        %v487 = vpop.f32.mrf.mxu0
        %v488 = vadd.f32 %v447, %v487
        %v489 = vpop.f32.mrf.mxu0
        %490 = vdwg.mxu0
        %vm491 = vcmask 113664
        %492 = vst.msk [vmem:[%s177] sm:$0xff] %vm491, %v485
        %493 = vst.msk [vmem:[%s177 + $0x8] sm:$0xff] %vm491, %v488
        %s494 = sand.u32 %s90, 1
        %s495 = sand.u32 %s90, 1
        %s496 = smul.addr %s495, 16
        %s497 = scalar_lea.vmem [#allocation2], %s496
        // Predicated region
        $region33: #{model_forward.1} parent=31 // pred_check
          %p498 = pneg %p100
        $region34: #{model_forward.1} parent=31 // pred_check_branch
          %500 = sbr.rel (%p498) target = $region36
        $region35: #{model_forward.1} parent=31 // pred_region
          %s501 = smul.u32 2, %s14
          %s502 = ssub.s32 3, %s501
          %p503 = scmp.lt.s32.totalorder %s502, 2
          %s504 = scalar_select %p503, %s502, 2
          %s505 = smul.u32 128, %s504
          %p506 = scmp.ne.s32.totalorder 0, %s505
          %s507 = smul.addr %s501, 8
          %s508 = scalar_lea.vmem %s3, %s507
          // Predicated region
          $region37: #{model_forward.1} parent=35 // pred_check
            %p509 = pneg %p506
          $region38: #{model_forward.1} parent=35 // pred_check_branch
            %511 = sbr.rel (%p509) target = $region40
          $region39: #{model_forward.1} parent=35 // pred_region
            // Predicated region
            $region41: #{model_forward.1} parent=39 // pred_check
              _
            $region42: #{model_forward.1} parent=39 // pred_check_branch
              %513 = sbr.rel (0) target = $region44
            $region43: #{model_forward.1} parent=39 // pred_region
              // Predicated region
              $region63: #{model_forward.1} parent=43 // pred_check
                _
              $region64: #{model_forward.1} parent=43 // pred_check_branch
                %565 = sbr.rel (0) target = $region66
              $region65: #{model_forward.1} parent=43 // pred_region
                %s566 = sshrl.u32 %s504, 1
                // While loop
                $region67: #{model_forward.1} parent=65 // loop_pre_header
                  _
                $region68: #{model_forward.1} parent=65 // loop_header
                  %s568 = sphi 0, %s570
                  %p569 = scmp.ge.s32.totalorder %s568, %s566
                  %s573 = sphi 0, %s582
                  %s574 = sphi %s497, %s585
                  %s575 = sphi %s508, %s586
                $region69: #{model_forward.1} parent=65 // loop_header_branch
                  %572 = sbr.rel (%p569) target = $region73
                $region70: #{model_forward.1} parent=65 // loop_body
                  %v576 = vld [vmem:[%s574] sm:$0xff]
                  %577 = vst [vmem:[%s575] sm:$0xff] %v576
                  %v578 = vld [vmem:[%s574 + $0x8] sm:$0xff]
                  %579 = vst [vmem:[%s575 + $0x8] sm:$0xff] %v578
                  %s580 = sadd.s32 1, %s573
                  %p581 = scmp.ge.s32.totalorder %s580, %s566
                  %s582 = scalar_select %p581, 0, %s580
                  %s583 = smul.u32 %s582, 16
                  %s584 = smul.u32 %s582, 16
                  %s585 = scalar_lea.vmem %s497, %s583 [#allocation2]
                  %s586 = scalar_lea.vmem %s508, %s584
                $region71: #{model_forward.1} parent=65 // loop_footer
                  %s570 = sadd.s32 %s568, 1
                $region72: #{model_forward.1} parent=65 // loop_footer_branch
                  %567 = sbr.rel target = $region68
                $region73: #{model_forward.1} parent=65 // loop_exit
                  _
                %s587 = sshrl.u32 %s504, 1
                %s588 = sand.u32 %s504, 1
                %s589 = smul.u32 %s587, 2
                %s590 = smul.u32 8, %s589
                %s591 = scalar_lea.vmem %s497, %s590 [#allocation2]
                %s592 = smul.u32 8, %s589
                %s593 = scalar_lea.vmem %s508, %s592
                // While loop
                $region74: #{model_forward.1} parent=65 // loop_pre_header
                  _
                $region75: #{model_forward.1} parent=65 // loop_header
                  %s595 = sphi 0, %s597
                  %p596 = scmp.ge.s32.totalorder %s595, %s588
                  %s600 = sphi 0, %s607
                  %s601 = sphi %s591, %s610
                  %s602 = sphi %s593, %s611
                $region76: #{model_forward.1} parent=65 // loop_header_branch
                  %599 = sbr.rel (%p596) target = $region80
                $region77: #{model_forward.1} parent=65 // loop_body
                  %v603 = vld [vmem:[%s601] sm:$0xff]
                  %604 = vst [vmem:[%s602] sm:$0xff] %v603
                  %s605 = sadd.s32 1, %s600
                  %p606 = scmp.ge.s32.totalorder %s605, %s588
                  %s607 = scalar_select %p606, 0, %s605
                  %s608 = smul.u32 %s607, 8
                  %s609 = smul.u32 %s607, 8
                  %s610 = scalar_lea.vmem %s591, %s608 [#allocation2]
                  %s611 = scalar_lea.vmem %s593, %s609
                $region78: #{model_forward.1} parent=65 // loop_footer
                  %s597 = sadd.s32 %s595, 1
                $region79: #{model_forward.1} parent=65 // loop_footer_branch
                  %594 = sbr.rel target = $region75
                $region80: #{model_forward.1} parent=65 // loop_exit
                  _
              $region66: #{model_forward.1} parent=43 // pred_fallthru
                _
              // Predicated region
              $region81: #{model_forward.1} parent=43 // pred_check
                _
              $region82: #{model_forward.1} parent=43 // pred_check_branch
                %613 = sbr.rel target = $region84
              $region83: #{model_forward.1} parent=43 // pred_region
                _
              $region84: #{model_forward.1} parent=43 // pred_fallthru
                _
            $region44: #{model_forward.1} parent=39 // pred_fallthru
              _
            // Predicated region
            $region45: #{model_forward.1} parent=39 // pred_check
              _
            $region46: #{model_forward.1} parent=39 // pred_check_branch
              %515 = sbr.rel target = $region48
            $region47: #{model_forward.1} parent=39 // pred_region
              %s517 = ssub.s32 256, 1
              %s518 = sshrl.u32 %s504, 1
              // While loop
              $region49: #{model_forward.1} parent=47 // loop_pre_header
                _
              $region50: #{model_forward.1} parent=47 // loop_header
                %s520 = sphi 0, %s522
                %p521 = scmp.ge.s32.totalorder %s520, %s518
                %s525 = sphi 0, %s534
                %s526 = sphi %s497, %s537
                %s527 = sphi %s508, %s538
              $region51: #{model_forward.1} parent=47 // loop_header_branch
                %524 = sbr.rel (%p521) target = $region55
              $region52: #{model_forward.1} parent=47 // loop_body
                %v528 = vld [vmem:[%s526] sm:%s517]
                %529 = vst [vmem:[%s527] sm:%s517] %v528
                %v530 = vld [vmem:[%s526 + $0x8] sm:%s517]
                %531 = vst [vmem:[%s527 + $0x8] sm:%s517] %v530
                %s532 = sadd.s32 1, %s525
                %p533 = scmp.ge.s32.totalorder %s532, %s518
                %s534 = scalar_select %p533, 0, %s532
                %s535 = smul.u32 %s534, 16
                %s536 = smul.u32 %s534, 16
                %s537 = scalar_lea.vmem %s497, %s535 [#allocation2]
                %s538 = scalar_lea.vmem %s508, %s536
              $region53: #{model_forward.1} parent=47 // loop_footer
                %s522 = sadd.s32 %s520, 1
              $region54: #{model_forward.1} parent=47 // loop_footer_branch
                %519 = sbr.rel target = $region50
              $region55: #{model_forward.1} parent=47 // loop_exit
                _
              %s539 = sshrl.u32 %s504, 1
              %s540 = sand.u32 %s504, 1
              %s541 = smul.u32 %s539, 2
              %s542 = smul.u32 8, %s541
              %s543 = scalar_lea.vmem %s497, %s542 [#allocation2]
              %s544 = smul.u32 8, %s541
              %s545 = scalar_lea.vmem %s508, %s544
              // While loop
              $region56: #{model_forward.1} parent=47 // loop_pre_header
                _
              $region57: #{model_forward.1} parent=47 // loop_header
                %s547 = sphi 0, %s549
                %p548 = scmp.ge.s32.totalorder %s547, %s540
                %s552 = sphi 0, %s559
                %s553 = sphi %s543, %s562
                %s554 = sphi %s545, %s563
              $region58: #{model_forward.1} parent=47 // loop_header_branch
                %551 = sbr.rel (%p548) target = $region62
              $region59: #{model_forward.1} parent=47 // loop_body
                %v555 = vld [vmem:[%s553] sm:%s517]
                %556 = vst [vmem:[%s554] sm:%s517] %v555
                %s557 = sadd.s32 1, %s552
                %p558 = scmp.ge.s32.totalorder %s557, %s540
                %s559 = scalar_select %p558, 0, %s557
                %s560 = smul.u32 %s559, 8
                %s561 = smul.u32 %s559, 8
                %s562 = scalar_lea.vmem %s543, %s560 [#allocation2]
                %s563 = scalar_lea.vmem %s545, %s561
              $region60: #{model_forward.1} parent=47 // loop_footer
                %s549 = sadd.s32 %s547, 1
              $region61: #{model_forward.1} parent=47 // loop_footer_branch
                %546 = sbr.rel target = $region57
              $region62: #{model_forward.1} parent=47 // loop_exit
                _
            $region48: #{model_forward.1} parent=39 // pred_fallthru
              _
          $region40: #{model_forward.1} parent=35 // pred_fallthru
            _
          %614 = vnop
        $region36: #{model_forward.1} parent=31 // pred_fallthru
          _
      $region32: #{model_forward.1} parent=5 // pred_fallthru
        _
      %p615 = scmp.le.s32.totalorder 2, %s9
      // Predicated region
      $region85: #{model_forward.1} parent=5 // pred_check
        %p616 = pneg %p615
      $region86: #{model_forward.1} parent=5 // pred_check_branch
        %618 = sbr.rel (%p616) target = $region88
      $region87: #{model_forward.1} parent=5 // pred_region
        %s619 = ssub.s32 %s9, 2
        // Predicated region
        $region89: #{model_forward.1} parent=87 // pred_check
          %p620 = pneg %p106
        $region90: #{model_forward.1} parent=87 // pred_check_branch
          %622 = sbr.rel (%p620) target = $region92
        $region91: #{model_forward.1} parent=87 // pred_region
          %s623 = sand.u32 %s91, 1
          %s624 = sand.u32 %s91, 1
          %s625 = smul.addr %s624, 16
          %s626 = scalar_lea.vmem [#allocation2], %s625
        $region92: #{model_forward.1} parent=87 // pred_fallthru
          _
      $region88: #{model_forward.1} parent=5 // pred_fallthru
        _
    $region6: #{model_forward.1} parent=1 // loop_footer
      %s13 = sadd.s32 1, %s9
    $region7: #{model_forward.1} parent=1 // loop_footer_branch
      %8 = sbr.rel target = $region3
    $region8: #{model_forward.1} parent=1 // loop_exit
      _

</llo_original>
